<compile_context>
chip_gen: v6e
topology: v6e:2x2x1
jax: 0.10.0
libtpu: 0.0.40
codegen_flags: <defaults>
</compile_context>

<pallas_src>
import functools

import jax
import jax.numpy as jnp
import numpy as np
from jax import lax
from jax.experimental import pallas as pl
from jax.experimental.pallas import tpu as pltpu

NEG_BIG = -1e30      # finite stand-in for -inf (avoids inf arithmetic in-kernel)
_N_BISECT = 30       # tau resolved to ~2^-30 of a unit interval -> << 1e-3


def _entity_opt_attn_kernel(q_ref, k_ref, v_ref, mask_ref, out_ref, *attn_refs,
                            inv_temperature, mxu_dtype, n_bisect):
    # q_ref:(BT,TQ,D)  k_ref:(BT,Lk,D)  v_ref:(BT,Lk,Dv)  mask_ref:(BT,TQ,Lk) int8
    m = mask_ref[...].astype(jnp.int32) != 0                      # True = masked out

    q = (q_ref[...].astype(jnp.float32) * inv_temperature).astype(mxu_dtype)
    k = k_ref[...].astype(mxu_dtype)

    # scores = (q / T) @ k^T per batch  -> MXU (bf16 inputs by default, f32 acc)
    scores = jnp.einsum('bqd,bkd->bqk', q, k,
                        preferred_element_type=jnp.float32)       # (BT,TQ,Lk)
    z = jnp.where(m, NEG_BIG, scores)

    # ---- sparsemax along the last axis via bisection on the threshold tau ----
    # g(tau) = sum(relu(z - tau)) is continuous & decreasing; sparsemax is
    # attn = relu(z - tau*) with g(tau*) = 1, and tau* lies in [max(z)-1, max(z)].
    # This keeps VMEM flat in Lk (no (TQ,Lk,Lk) intermediate).
    z_max = jnp.max(z, axis=-1, keepdims=True)                    # (BT,TQ,1)
    lo = z_max - 1.0
    hi = z_max

    def _bisect(_, carry):
        lo_c, hi_c = carry
        mid = 0.5 * (lo_c + hi_c)
        g = jnp.sum(jnp.maximum(z - mid, 0.0), axis=-1, keepdims=True)
        gt = g > 1.0
        return jnp.where(gt, mid, lo_c), jnp.where(gt, hi_c, mid)

    lo, hi = lax.fori_loop(0, n_bisect, _bisect, (lo, hi))
    tau = 0.5 * (lo + hi)
    attn = jnp.maximum(z - tau, 0.0)

    # masked columns -> 0 explicitly; fully-masked rows -> 0 (matches masked_fill)
    attn = jnp.where(m, 0.0, attn)
    num_unmasked = jnp.sum(jnp.where(m, 0.0, 1.0), axis=-1, keepdims=True)
    attn = jnp.where(num_unmasked == 0.0, 0.0, attn)

    # TODO(synk): nn.Dropout(dropout_attn=0.0) is identity here; no RNG dropout applied.

    out = jnp.einsum('bqk,bkv->bqv', attn.astype(mxu_dtype),
                     v_ref[...].astype(mxu_dtype),
                     preferred_element_type=jnp.float32)          # (BT,TQ,Dv)
    out_ref[...] = out.astype(out_ref.dtype)
    if attn_refs:                                                 # static python branch
        attn_refs[0][...] = attn.astype(attn_refs[0].dtype)


def _pick_divisor(n, cap):
    cap = int(max(1, min(n, cap)))
    for d in range(cap, 0, -1):
        if n % d == 0:
            return d
    return 1


def _tile_vmem_bytes(bt, tq, lk, d, dv):
    # double-buffered IO tiles (f32 tensors, int8 mask) + in-kernel f32 temporaries
    io = bt * ((tq * d + lk * d + lk * dv + tq * dv) * 4 + tq * lk * (1 + 4))
    scratch = 8 * bt * tq * lk * 4
    return 2 * io + scratch


def entity_opt_attention(q, k, v, mask=None, *, temperature,
                         mxu_dtype=jnp.bfloat16, attn_dtype=None,
                         return_attn=True, n_bisect=_N_BISECT,
                         vmem_budget_bytes=24 * 1024 * 1024):
    """Pallas TPU forward of ScaledDotProductEntityOPTAttention.

    Returns (out, attn) like the PyTorch module. attn is None if
    return_attn=False (saves the B*Lq*Lk HBM writeback).
    """
    B, Lq, D = q.shape
    Bk, Lk, Dk = k.shape
    Bv, Lkv, Dv = v.shape
    assert (B, D) == (Bk, Dk) and (B, Lk) == (Bv, Lkv)

    if mask is None:
        mask = jnp.zeros((B, Lq, Lk), dtype=jnp.int8)   # all-unmasked == no mask
    else:
        mask = mask.astype(jnp.int8)                    # 1 B/elem HBM traffic, not 4

    out_dtype = q.dtype
    attn_dtype = out_dtype if attn_dtype is None else attn_dtype

    # ---- tile selection: Lq tiles + several batches per grid step ------------
    TQ = _pick_divisor(Lq, 128)
    BT = _pick_divisor(B, max(1, 256 // TQ))   # fold batches so BT*TQ is vreg/MXU sized
    while BT > 1 and _tile_vmem_bytes(BT, TQ, Lk, D, Dv) > vmem_budget_bytes:
        BT = _pick_divisor(B, BT // 2)
    while TQ > 8 and _tile_vmem_bytes(BT, TQ, Lk, D, Dv) > vmem_budget_bytes:
        TQ = _pick_divisor(Lq, TQ // 2)
    nb, nq = B // BT, Lq // TQ

    kernel = functools.partial(_entity_opt_attn_kernel,
                               inv_temperature=1.0 / float(temperature),
                               mxu_dtype=mxu_dtype,
                               n_bisect=int(n_bisect))

    in_specs = [
        pl.BlockSpec((BT, TQ, D), lambda b, i: (b, i, 0)),
        pl.BlockSpec((BT, Lk, D), lambda b, i: (b, 0, 0)),    # resident across Lq tiles
        pl.BlockSpec((BT, Lk, Dv), lambda b, i: (b, 0, 0)),   # resident across Lq tiles
        pl.BlockSpec((BT, TQ, Lk), lambda b, i: (b, i, 0)),
    ]
    out_specs = [pl.BlockSpec((BT, TQ, Dv), lambda b, i: (b, i, 0))]
    out_shapes = [jax.ShapeDtypeStruct((B, Lq, Dv), out_dtype)]
    if return_attn:
        out_specs.append(pl.BlockSpec((BT, TQ, Lk), lambda b, i: (b, i, 0)))
        out_shapes.append(jax.ShapeDtypeStruct((B, Lq, Lk), attn_dtype))

    grid_spec = pltpu.PrefetchScalarGridSpec(
        num_scalar_prefetch=0,
        grid=(nb, nq),
        in_specs=in_specs,
        out_specs=out_specs,
    )

    results = pl.pallas_call(
        kernel,
        out_shape=tuple(out_shapes),
        grid_spec=grid_spec,
        compiler_params=pltpu.CompilerParams(
            dimension_semantics=("parallel", "parallel"),
            vmem_limit_bytes=48 * 1024 * 1024,
        ),
    )(q, k, v, mask)

    if return_attn:
        out, attn = results
        return out, attn
    return results[0], None


# ---------------- pure-JAX reference (for the correctness check) ----------------
def _sparsemax_ref(z):
    K = z.shape[-1]
    z_sorted = jnp.sort(z, axis=-1)[..., ::-1]
    cssv = jnp.cumsum(z_sorted, axis=-1)
    rng = jnp.arange(1, K + 1, dtype=z.dtype)
    cond = (1.0 + rng * z_sorted) > cssv
    k_sz = jnp.sum(cond.astype(z.dtype), axis=-1, keepdims=True)
    s = jnp.sum(jnp.where(cond, z_sorted, 0.0), axis=-1, keepdims=True)
    tau = (s - 1.0) / k_sz
    return jnp.maximum(z - tau, 0.0)


def _ref_forward(q, k, v, mask, temperature):
    attn = jnp.einsum('bqd,bkd->bqk', q / temperature, k,
                      precision=jax.lax.Precision.HIGHEST)
    m = mask.astype(bool)
    attn = jnp.where(m, -jnp.inf, attn)
    inf_mask = jnp.all(m, axis=2, keepdims=True)
    attn = jnp.where(inf_mask, 0.0, attn)
    attn = _sparsemax_ref(attn)
    attn = jnp.where(inf_mask, 0.0, attn)
    out = jnp.einsum('bqk,bkv->bqv', attn, v,
                     precision=jax.lax.Precision.HIGHEST)
    return out, attn


if __name__ == "__main__":
    B, Lq, Lk, D, Dv = 2, 8, 8, 32, 32
    temperature = float(np.sqrt(D))   # deterministic "parameter" from __init__

    key = jax.random.PRNGKey(0)
    kq, kk, kv, km = jax.random.split(key, 4)
    q = jax.random.normal(kq, (B, Lq, D), dtype=jnp.float32)
    k = jax.random.normal(kk, (B, Lk, D), dtype=jnp.float32)
    v = jax.random.normal(kv, (B, Lk, Dv), dtype=jnp.float32)

    # mask: 1 = masked-out; include one fully-masked row to exercise that path.
    mask = (jax.random.uniform(km, (B, Lq, Lk)) < 0.3).astype(jnp.int32)
    mask = mask.at[0, 0, :].set(1)

    out_ref, attn_ref = _ref_forward(q, k, v, mask, temperature)

    # ---- exact-precision path (f32 MXU inputs): tight tolerance ----
    out32, attn32 = entity_opt_attention(q, k, v, mask, temperature=temperature,
                                         mxu_dtype=jnp.float32)
    out32 = jax.block_until_ready(out32)
    attn32 = jax.block_until_ready(attn32)
    np.testing.assert_allclose(np.asarray(attn32), np.asarray(attn_ref),
                               rtol=1e-3, atol=1e-3)
    np.testing.assert_allclose(np.asarray(out32), np.asarray(out_ref),
                               rtol=1e-3, atol=1e-3)

    # ---- default fast path (bf16 MXU inputs, f32 accumulate): mixed-precision tol ----
    out_bf, attn_bf = entity_opt_attention(q, k, v, mask, temperature=temperature)
    out_bf = jax.block_until_ready(out_bf)
    attn_bf = jax.block_until_ready(attn_bf)
    np.testing.assert_allclose(np.asarray(attn_bf), np.asarray(attn_ref),
                               rtol=1e-1, atol=1e-1)
    np.testing.assert_allclose(np.asarray(out_bf), np.asarray(out_ref),
                               rtol=1e-1, atol=1e-1)

    # sanity: rows of attn sum to 1 (or 0 if fully masked)
    row_sums = np.asarray(attn32).sum(-1)
    assert np.all((np.abs(row_sums - 1.0) < 1e-3) | (np.abs(row_sums) < 1e-6))

    print("KERNEL_OK")
</pallas_src>

<mosaic_0001>
module attributes {stable_mosaic.version = 11 : i64} {
  func.func @_entity_opt_attn_kernel(%arg0: i32, %arg1: i32, %arg2: memref<2x8x32xf32, #tpu.memory_space<vmem>>, %arg3: memref<2x8x32xf32, #tpu.memory_space<vmem>>, %arg4: memref<2x8x32xf32, #tpu.memory_space<vmem>>, %arg5: memref<2x8x8xi8, #tpu.memory_space<vmem>>, %arg6: memref<2x8x32xf32, #tpu.memory_space<vmem>>, %arg7: memref<2x8x8xf32, #tpu.memory_space<vmem>>) attributes {dimension_semantics = [#tpu.dimension_semantics<parallel>, #tpu.dimension_semantics<parallel>], iteration_bounds = array<i64: 1, 1>, scalar_prefetch = 0 : i64, scratch_operands = 0 : i64, tpu.core_type = #tpu.core_type<tc>, window_params = [{transform_indices = @transform_0, window_bounds = array<i64: 2, 8, 32>}, {transform_indices = @transform_1, window_bounds = array<i64: 2, 8, 32>}, {transform_indices = @transform_2, window_bounds = array<i64: 2, 8, 32>}, {transform_indices = @transform_3, window_bounds = array<i64: 2, 8, 8>}, {transform_indices = @transform_4, window_bounds = array<i64: 2, 8, 32>}, {transform_indices = @transform_5, window_bounds = array<i64: 2, 8, 8>}]} {
    %c0 = arith.constant 0 : index
    %c0_0 = arith.constant 0 : index
    %c0_1 = arith.constant 0 : index
    %0 = vector.load %arg5[%c0, %c0_0, %c0_1] : memref<2x8x8xi8, #tpu.memory_space<vmem>>, vector<2x8x8xi8>
    %1 = arith.extsi %0 : vector<2x8x8xi8> to vector<2x8x8xi32>
    %c0_i32 = arith.constant 0 : i32
    %2 = vector.broadcast %c0_i32 : i32 to vector<2x8x8xi32>
    %3 = arith.cmpi ne, %1, %2 : vector<2x8x8xi32>
    %c0_2 = arith.constant 0 : index
    %c0_3 = arith.constant 0 : index
    %c0_4 = arith.constant 0 : index
    %4 = vector.load %arg2[%c0_2, %c0_3, %c0_4] : memref<2x8x32xf32, #tpu.memory_space<vmem>>, vector<2x8x32xf32>
    %cst = arith.constant 0.176776692 : f32
    %5 = vector.broadcast %cst : f32 to vector<2x8x32xf32>
    %6 = arith.mulf %4, %5 : vector<2x8x32xf32>
    %c0_5 = arith.constant 0 : index
    %c0_6 = arith.constant 0 : index
    %c0_7 = arith.constant 0 : index
    %7 = vector.load %arg3[%c0_5, %c0_6, %c0_7] : memref<2x8x32xf32, #tpu.memory_space<vmem>>, vector<2x8x32xf32>
    "tpu.trace_start"() <{level = 10 : i32, message = "bqd,bkd->bqk"}> : () -> ()
    %cst_8 = arith.constant dense<0.000000e+00> : vector<2x8x8xf32>
    %8 = tpu.matmul %6, %7, %cst_8 {dimension_numbers = #tpu.dot_dimension_numbers<[2], [2], [1], [1], [0, 0, 0, 1, 1, 1], [0], [0]>} : vector<2x8x32xf32>, vector<2x8x32xf32>, vector<2x8x8xf32> -> vector<2x8x8xf32>
    %cst_9 = arith.constant -1.000000e+30 : f32
    "tpu.trace_stop"() : () -> ()
    %9 = vector.broadcast %cst_9 : f32 to vector<2x8x8xf32>
    %10 = arith.select %3, %9, %8 : vector<2x8x8xi1>, vector<2x8x8xf32>
    %cst_10 = arith.constant dense<0xFF800000> : vector<2x8xf32>
    %11 = vector.multi_reduction <maximumf>, %10, %cst_10 [2] : vector<2x8x8xf32> to vector<2x8xf32>
    %12 = vector.shape_cast %11 : vector<2x8xf32> to vector<2x8x1xf32>
    %cst_11 = arith.constant 1.000000e+00 : f32
    %13 = vector.broadcast %cst_11 : f32 to vector<2x8x1xf32>
    %14 = arith.subf %12, %13 : vector<2x8x1xf32>
    %c0_i32_12 = arith.constant 0 : i32
    %c30_i32 = arith.constant 30 : i32
    %15 = arith.addi %c0_i32_12, %c30_i32 : i32
    %c1_i32 = arith.constant 1 : i32
    %16:2 = scf.for %arg8 = %c0_i32_12 to %15 step %c1_i32 iter_args(%arg9 = %14, %arg10 = %12) -> (vector<2x8x1xf32>, vector<2x8x1xf32>)  : i32 {
      %41 = arith.addf %arg9, %arg10 : vector<2x8x1xf32>
      %cst_31 = arith.constant 5.000000e-01 : f32
      %42 = vector.broadcast %cst_31 : f32 to vector<2x8x1xf32>
      %43 = arith.mulf %42, %41 : vector<2x8x1xf32>
      %44 = vector.broadcast %43 : vector<2x8x1xf32> to vector<2x8x8xf32>
      %45 = arith.subf %10, %44 : vector<2x8x8xf32>
      %cst_32 = arith.constant 0.000000e+00 : f32
      %46 = vector.broadcast %cst_32 : f32 to vector<2x8x8xf32>
      %47 = arith.maximumf %45, %46 : vector<2x8x8xf32>
      %cst_33 = arith.constant dense<0.000000e+00> : vector<2x8xf32>
      %48 = vector.multi_reduction <add>, %47, %cst_33 [2] : vector<2x8x8xf32> to vector<2x8xf32>
      %49 = vector.shape_cast %48 : vector<2x8xf32> to vector<2x8x1xf32>
      %cst_34 = arith.constant 1.000000e+00 : f32
      %50 = vector.broadcast %cst_34 : f32 to vector<2x8x1xf32>
      %51 = arith.cmpf ogt, %49, %50 : vector<2x8x1xf32>
      %52 = arith.select %51, %43, %arg9 : vector<2x8x1xi1>, vector<2x8x1xf32>
      %53 = arith.select %51, %arg10, %43 : vector<2x8x1xi1>, vector<2x8x1xf32>
      scf.yield %52, %53 : vector<2x8x1xf32>, vector<2x8x1xf32>
    }
    %17 = arith.addf %16#0, %16#1 : vector<2x8x1xf32>
    %cst_13 = arith.constant 5.000000e-01 : f32
    %18 = vector.broadcast %cst_13 : f32 to vector<2x8x1xf32>
    %19 = arith.mulf %18, %17 : vector<2x8x1xf32>
    %20 = vector.broadcast %19 : vector<2x8x1xf32> to vector<2x8x8xf32>
    %21 = arith.subf %10, %20 : vector<2x8x8xf32>
    %cst_14 = arith.constant 0.000000e+00 : f32
    %22 = vector.broadcast %cst_14 : f32 to vector<2x8x8xf32>
    %23 = arith.maximumf %21, %22 : vector<2x8x8xf32>
    %cst_15 = arith.constant 0.000000e+00 : f32
    %24 = vector.broadcast %cst_15 : f32 to vector<2x8x8xf32>
    %25 = arith.select %3, %24, %23 : vector<2x8x8xi1>, vector<2x8x8xf32>
    %cst_16 = arith.constant 0.000000e+00 : f32
    %cst_17 = arith.constant 1.000000e+00 : f32
    %26 = vector.broadcast %cst_16 : f32 to vector<2x8x8xf32>
    %27 = vector.broadcast %cst_17 : f32 to vector<2x8x8xf32>
    %28 = arith.select %3, %26, %27 : vector<2x8x8xi1>, vector<2x8x8xf32>
    %cst_18 = arith.constant dense<0.000000e+00> : vector<2x8xf32>
    %29 = vector.multi_reduction <add>, %28, %cst_18 [2] : vector<2x8x8xf32> to vector<2x8xf32>
    %30 = vector.shape_cast %29 : vector<2x8xf32> to vector<2x8x1xf32>
    %cst_19 = arith.constant 0.000000e+00 : f32
    %31 = vector.broadcast %cst_19 : f32 to vector<2x8x1xf32>
    %32 = arith.cmpf oeq, %30, %31 : vector<2x8x1xf32>
    %cst_20 = arith.constant 0.000000e+00 : f32
    %33 = vector.shape_cast %32 : vector<2x8x1xi1> to vector<2x8x1xi1>
    %34 = vector.broadcast %33 : vector<2x8x1xi1> to vector<2x8x8xi1>
    %35 = vector.broadcast %cst_20 : f32 to vector<2x8x8xf32>
    %36 = arith.select %34, %35, %25 : vector<2x8x8xi1>, vector<2x8x8xf32>
    %c0_21 = arith.constant 0 : index
    %c0_22 = arith.constant 0 : index
    %c0_23 = arith.constant 0 : index
    %37 = vector.load %arg4[%c0_21, %c0_22, %c0_23] : memref<2x8x32xf32, #tpu.memory_space<vmem>>, vector<2x8x32xf32>
    "tpu.trace_start"() <{level = 10 : i32, message = "bqk,bkv->bqv"}> : () -> ()
    %cst_24 = arith.constant dense<0.000000e+00> : vector<2x8x32xf32>
    %38 = tpu.matmul %36, %37, %cst_24 {dimension_numbers = #tpu.dot_dimension_numbers<[2], [1], [1], [2], [0, 0, 0, 1, 1, 2], [0], [0]>} : vector<2x8x8xf32>, vector<2x8x32xf32>, vector<2x8x32xf32> -> vector<2x8x32xf32>
    "tpu.trace_stop"() : () -> ()
    %c0_25 = arith.constant 0 : index
    %c0_26 = arith.constant 0 : index
    %c0_27 = arith.constant 0 : index
    %39 = vector.load %arg6[%c0_25, %c0_26, %c0_27] : memref<2x8x32xf32, #tpu.memory_space<vmem>>, vector<2x8x32xf32>
    tpu.vector_store %arg6[%c0_25, %c0_26, %c0_27], %38 {strides = array<i32>} : memref<2x8x32xf32, #tpu.memory_space<vmem>>, vector<2x8x32xf32>,
    %c0_28 = arith.constant 0 : index
    %c0_29 = arith.constant 0 : index
    %c0_30 = arith.constant 0 : index
    %40 = vector.load %arg7[%c0_28, %c0_29, %c0_30] : memref<2x8x8xf32, #tpu.memory_space<vmem>>, vector<2x8x8xf32>
    tpu.vector_store %arg7[%c0_28, %c0_29, %c0_30], %36 {strides = array<i32>} : memref<2x8x8xf32, #tpu.memory_space<vmem>>, vector<2x8x8xf32>,
    return
  }
  func.func @transform_0(%arg0: i32, %arg1: i32) -> (i32, i32, i32) {
    %c0_i32 = arith.constant 0 : i32
    %c0_i32_0 = arith.constant 0 : i32
    return %arg0, %arg1, %c0_i32 : i32, i32, i32
  }
  func.func @transform_1(%arg0: i32, %arg1: i32) -> (i32, i32, i32) {
    %c0_i32 = arith.constant 0 : i32
    %c0_i32_0 = arith.constant 0 : i32
    %c0_i32_1 = arith.constant 0 : i32
    return %arg0, %c0_i32, %c0_i32_0 : i32, i32, i32
  }
  func.func @transform_2(%arg0: i32, %arg1: i32) -> (i32, i32, i32) {
    %c0_i32 = arith.constant 0 : i32
    %c0_i32_0 = arith.constant 0 : i32
    %c0_i32_1 = arith.constant 0 : i32
    return %arg0, %c0_i32, %c0_i32_0 : i32, i32, i32
  }
  func.func @transform_3(%arg0: i32, %arg1: i32) -> (i32, i32, i32) {
    %c0_i32 = arith.constant 0 : i32
    %c0_i32_0 = arith.constant 0 : i32
    return %arg0, %arg1, %c0_i32 : i32, i32, i32
  }
  func.func @transform_4(%arg0: i32, %arg1: i32) -> (i32, i32, i32) {
    %c0_i32 = arith.constant 0 : i32
    %c0_i32_0 = arith.constant 0 : i32
    return %arg0, %arg1, %c0_i32 : i32, i32, i32
  }
  func.func @transform_5(%arg0: i32, %arg1: i32) -> (i32, i32, i32) {
    %c0_i32 = arith.constant 0 : i32
    %c0_i32_0 = arith.constant 0 : i32
    return %arg0, %arg1, %c0_i32 : i32, i32, i32
  }
}

</mosaic_0001>

<llo_original>
// kernel: tpu_custom_call.1
$region0: #{tpu_custom_call.1}
  #allocation0 [shape = 'u32[]', space=smem, size = 0x4, offset = 0x4, fixed_abs, tag = 'smem constant byte address 0x4 - core index']
  #allocation1 [shape = 'u32[144,128]{1,0:T(1,128)}', space=vmem, size = 0x12000, scoped, tag = 'internal scratch']
  %s0 = inlined_call_operand.hbm [shape: f32[2,8,32], index: 0, kind: input, shape index: {}]
  %s1 = inlined_call_operand.hbm [shape: f32[2,8,32], index: 1, kind: input, shape index: {}]
  %s2 = inlined_call_operand.hbm [shape: f32[2,8,32], index: 2, kind: input, shape index: {}]
  %s3 = inlined_call_operand.vmem [shape: s8[2,8,8], index: 3, kind: input, shape index: {}]
  %s4 = inlined_call_operand.hbm [shape: f32[2,8,32], index: 4, kind: output, shape index: {0}]
  %s5 = inlined_call_operand.hbm [shape: f32[2,8,8], index: 5, kind: output, shape index: {1}]
  %6 = xla_tuple %s4, %s5
  %s7 = sld [smem:[#allocation0]]
  $region53: #{tpu_custom_call.1} parent=0
    _
  %s9 = ssub.s32 1, %s7
  %s10 = scalar_select 0, %s9, %s7
  $region1: #{tpu_custom_call.1} parent=0
    #allocation2 [shape = 'u8[8192]{0}', space=vmem, size = 0x2000, scoped, tag = 'input window, operand 0, single buffered']
    #allocation3 [shape = 's32[1]{0}', space=sflag, size = 0x4, scoped, tag = 'scoped memory for tpu_custom_call.1']
    #allocation4 [shape = 's32[1]{0}', space=sflag, size = 0x4, scoped, tag = 'scoped memory for tpu_custom_call.1']
    #allocation5 [shape = 'u8[8192]{0}', space=vmem, size = 0x2000, scoped, tag = 'input window, operand 1, single buffered']
    #allocation6 [shape = 's32[1]{0}', space=sflag, size = 0x4, scoped, tag = 'scoped memory for tpu_custom_call.1']
    #allocation7 [shape = 'u8[8192]{0}', space=vmem, size = 0x2000, scoped, tag = 'input window, operand 2, single buffered']
    #allocation8 [shape = 'u8[8192]{0}', space=vmem, size = 0x2000, scoped, tag = 'output window, operand 0, single buffered']
    #allocation9 [shape = 'u8[8192]{0}', space=vmem, size = 0x2000, scoped, tag = 'output window, operand 1, single buffered']
    #allocation10 [shape = 's32[1]{0}', space=sflag, size = 0x4, scoped, tag = 'scoped memory for tpu_custom_call.1']
    %11 = vsyncpa [#allocation3], 0
    %12 = vsyncpa [#allocation6], 0
    %13 = vsyncpa [#allocation4], 0
    %14 = vsyncpa [#allocation10], 0
    // Predicated region
    $region2: #{tpu_custom_call.1} parent=1 // pred_check
      _
    $region3: #{tpu_custom_call.1} parent=1 // pred_check_branch
      %16 = sbr.rel (0) target = $region5
    $region4: #{tpu_custom_call.1} parent=1 // pred_region
      %s18 = ssub.s32 256, 256
      %19 = vsyncadd [#allocation3], %s18
      %s20 = sshll.u32 [#allocation2], 4
      %s21 = int_to_ptr.vmem [resolvable:$true] %s20
      %26 = dma.hbm_to_vmem [thread:$0]  %s0, 256, %s21, [#allocation3], 128, 128, 8
    $region5: #{tpu_custom_call.1} parent=1 // pred_fallthru
      _
    // Predicated region
    $region6: #{tpu_custom_call.1} parent=1 // pred_check
      _
    $region7: #{tpu_custom_call.1} parent=1 // pred_check_branch
      %28 = sbr.rel (0) target = $region9
    $region8: #{tpu_custom_call.1} parent=1 // pred_region
      %s30 = ssub.s32 256, 256
      %31 = vsyncadd [#allocation6], %s30
      %s32 = sshll.u32 [#allocation5], 4
      %s33 = int_to_ptr.vmem [resolvable:$true] %s32
      %38 = dma.hbm_to_vmem [thread:$0]  %s1, 256, %s33, [#allocation6], 128, 128, 8
    $region9: #{tpu_custom_call.1} parent=1 // pred_fallthru
      _
    // Predicated region
    $region10: #{tpu_custom_call.1} parent=1 // pred_check
      _
    $region11: #{tpu_custom_call.1} parent=1 // pred_check_branch
      %40 = sbr.rel (0) target = $region13
    $region12: #{tpu_custom_call.1} parent=1 // pred_region
      %s42 = ssub.s32 256, 256
      %43 = vsyncadd [#allocation6], %s42
      %s44 = sshll.u32 [#allocation7], 4
      %s45 = int_to_ptr.vmem [resolvable:$true] %s44
      %50 = dma.hbm_to_vmem [thread:$0]  %s2, 256, %s45, [#allocation6], 128, 128, 8
    $region13: #{tpu_custom_call.1} parent=1 // pred_fallthru
      _
    // Predicated region
    $region14: #{tpu_custom_call.1} parent=1 // pred_check
      _
    $region15: #{tpu_custom_call.1} parent=1 // pred_check_branch
      %52 = sbr.rel (0) target = $region17
    $region16: #{tpu_custom_call.1} parent=1 // pred_region
      _
    $region17: #{tpu_custom_call.1} parent=1 // pred_fallthru
      _
    // Predicated region
    $region18: #{tpu_custom_call.1} parent=1 // pred_check
      _
    $region19: #{tpu_custom_call.1} parent=1 // pred_check_branch
      %54 = sbr.rel (0) target = $region21
    $region20: #{tpu_custom_call.1} parent=1 // pred_region
      %55 = dma.done [#allocation3], 256
    $region21: #{tpu_custom_call.1} parent=1 // pred_fallthru
      _
    // Predicated region
    $region22: #{tpu_custom_call.1} parent=1 // pred_check
      _
    $region23: #{tpu_custom_call.1} parent=1 // pred_check_branch
      %57 = sbr.rel (0) target = $region25
    $region24: #{tpu_custom_call.1} parent=1 // pred_region
      %58 = dma.done [#allocation6], 256
    $region25: #{tpu_custom_call.1} parent=1 // pred_fallthru
      _
    // Predicated region
    $region26: #{tpu_custom_call.1} parent=1 // pred_check
      _
    $region27: #{tpu_custom_call.1} parent=1 // pred_check_branch
      %60 = sbr.rel (0) target = $region29
    $region28: #{tpu_custom_call.1} parent=1 // pred_region
      %61 = dma.done [#allocation6], 256
    $region29: #{tpu_custom_call.1} parent=1 // pred_fallthru
      _
    %v62 = vld [vmem:[%s3] sm:$0x3]
    %v63 = vld [vmem:[%s3 + $0x2] sm:$0x3]
    %v64 = vunpack.c.0.s8 %v62
    %v65 = vunpack.c.0.s8 %v63
    %vm66 = vcmp.ne.s32.totalorder %v64, 0
    %vm67 = vcmp.ne.s32.totalorder %v65, 0
    %v68 = vld [vmem:[#allocation2] sm:$0xff]
    %v69 = vld [vmem:[#allocation2 + $0x8] sm:$0xff]
    %v70 = vmul.f32 %v68, 0.17677669
    %v71 = vmul.f32 %v69, 0.17677669
    %v72 = vld [vmem:[#allocation5] sm:$0xff]
    %v73 = vld [vmem:[#allocation5 + $0x8] sm:$0xff]
    %vm74 = vcmask 261120
    %v76 = vsel %vm74, %v70, 0
    %v79 = vsel %vm74, %v72, 0
    %81 = vmatprep.subr.mxu0 0.0
    %82 = vmatpush1.xpose.msra.mxu0 0.0
    %83 = vmatprep.subr.mxu0 0.0
    %84 = vmatpush1.xpose.msra.mxu0 0.0
    %85 = vmatprep.subr.mxu0 0.0
    %86 = vmatpush1.xpose.msra.mxu0 0.0
    %87 = vmatprep.subr.mxu0 0.0
    %88 = vmatpush1.xpose.msra.mxu0 0.0
    %89 = vmatprep.subr.mxu0 0.0
    %90 = vmatpush1.xpose.msra.mxu0 0.0
    %91 = vmatprep.subr.mxu0 0.0
    %92 = vmatpush1.xpose.msra.mxu0 0.0
    %93 = vmatprep.subr.mxu0 0.0
    %94 = vmatpush1.xpose.msra.mxu0 0.0
    %95 = vmatprep.subr.mxu0 0.0
    %96 = vmatpush1.xpose.msra.mxu0 0.0
    %97 = vmatprep.subr.mxu0 0.0
    %98 = vmatpush1.xpose.msra.mxu0 0.0
    %99 = vmatprep.subr.mxu0 0.0
    %100 = vmatpush1.xpose.msra.mxu0 0.0
    %101 = vmatprep.subr.mxu0 0.0
    %102 = vmatpush1.xpose.msra.mxu0 0.0
    %103 = vmatprep.subr.mxu0 0.0
    %104 = vmatpush1.xpose.msra.mxu0 0.0
    %105 = vmatprep.subr.mxu0 0.0
    %106 = vmatpush1.xpose.msra.mxu0 0.0
    %107 = vmatprep.subr.mxu0 0.0
    %108 = vmatpush1.xpose.msra.mxu0 0.0
    %109 = vmatprep.subr.mxu0 0.0
    %110 = vmatpush1.xpose.msra.mxu0 0.0
    %111 = vmatprep.subr.mxu0 0.0
    %112 = vmatpush1.xpose.msra.mxu0 %v79
    %113 = vmatprep.subr.mxu0 0.0
    %114 = vmatpush2.xpose.msra.mxu0 0.0
    %115 = vmatprep.subr.mxu0 0.0
    %116 = vmatpush2.xpose.msra.mxu0 0.0
    %117 = vmatprep.subr.mxu0 0.0
    %118 = vmatpush2.xpose.msra.mxu0 0.0
    %119 = vmatprep.subr.mxu0 0.0
    %120 = vmatpush2.xpose.msra.mxu0 0.0
    %121 = vmatprep.subr.mxu0 0.0
    %122 = vmatpush2.xpose.msra.mxu0 0.0
    %123 = vmatprep.subr.mxu0 0.0
    %124 = vmatpush2.xpose.msra.mxu0 0.0
    %125 = vmatprep.subr.mxu0 0.0
    %126 = vmatpush2.xpose.msra.mxu0 0.0
    %127 = vmatprep.subr.mxu0 0.0
    %128 = vmatpush2.xpose.msra.mxu0 0.0
    %129 = vmatprep.subr.mxu0 0.0
    %130 = vmatpush2.xpose.msra.mxu0 0.0
    %131 = vmatprep.subr.mxu0 0.0
    %132 = vmatpush2.xpose.msra.mxu0 0.0
    %133 = vmatprep.subr.mxu0 0.0
    %134 = vmatpush2.xpose.msra.mxu0 0.0
    %135 = vmatprep.subr.mxu0 0.0
    %136 = vmatpush2.xpose.msra.mxu0 0.0
    %137 = vmatprep.subr.mxu0 0.0
    %138 = vmatpush2.xpose.msra.mxu0 0.0
    %139 = vmatprep.subr.mxu0 0.0
    %140 = vmatpush2.xpose.msra.mxu0 0.0
    %141 = vmatprep.subr.mxu0 0.0
    %142 = vmatpush2.xpose.msra.mxu0 0.0
    %143 = vmatprep.subr.mxu0 0.0
    %144 = vmatpush2.xpose.msra.mxu0 0.0
    %145 = vmatprep.mubr.f32.mxu0 0.0
    %146 = vmatmul.mubr.f32.gmra.mxu0 %v76
    %v147 = vpop.f32.mrf.mxu0
    %v148 = vadd.f32 0.0, %v147
    %v149 = vpop.f32.mrf.mxu0
    %150 = vdwg.mxu0
    %v152 = vsel %vm74, %v71, 0
    %v155 = vsel %vm74, %v73, 0
    %157 = vmatprep.subr.mxu0 0.0
    %158 = vmatpush1.xpose.msra.mxu0 0.0
    %159 = vmatprep.subr.mxu0 0.0
    %160 = vmatpush1.xpose.msra.mxu0 0.0
    %161 = vmatprep.subr.mxu0 0.0
    %162 = vmatpush1.xpose.msra.mxu0 0.0
    %163 = vmatprep.subr.mxu0 0.0
    %164 = vmatpush1.xpose.msra.mxu0 0.0
    %165 = vmatprep.subr.mxu0 0.0
    %166 = vmatpush1.xpose.msra.mxu0 0.0
    %167 = vmatprep.subr.mxu0 0.0
    %168 = vmatpush1.xpose.msra.mxu0 0.0
    %169 = vmatprep.subr.mxu0 0.0
    %170 = vmatpush1.xpose.msra.mxu0 0.0
    %171 = vmatprep.subr.mxu0 0.0
    %172 = vmatpush1.xpose.msra.mxu0 0.0
    %173 = vmatprep.subr.mxu0 0.0
    %174 = vmatpush1.xpose.msra.mxu0 0.0
    %175 = vmatprep.subr.mxu0 0.0
    %176 = vmatpush1.xpose.msra.mxu0 0.0
    %177 = vmatprep.subr.mxu0 0.0
    %178 = vmatpush1.xpose.msra.mxu0 0.0
    %179 = vmatprep.subr.mxu0 0.0
    %180 = vmatpush1.xpose.msra.mxu0 0.0
    %181 = vmatprep.subr.mxu0 0.0
    %182 = vmatpush1.xpose.msra.mxu0 0.0
    %183 = vmatprep.subr.mxu0 0.0
    %184 = vmatpush1.xpose.msra.mxu0 0.0
    %185 = vmatprep.subr.mxu0 0.0
    %186 = vmatpush1.xpose.msra.mxu0 0.0
    %187 = vmatprep.subr.mxu0 0.0
    %188 = vmatpush1.xpose.msra.mxu0 %v155
    %189 = vmatprep.subr.mxu0 0.0
    %190 = vmatpush2.xpose.msra.mxu0 0.0
    %191 = vmatprep.subr.mxu0 0.0
    %192 = vmatpush2.xpose.msra.mxu0 0.0
    %193 = vmatprep.subr.mxu0 0.0
    %194 = vmatpush2.xpose.msra.mxu0 0.0
    %195 = vmatprep.subr.mxu0 0.0
    %196 = vmatpush2.xpose.msra.mxu0 0.0
    %197 = vmatprep.subr.mxu0 0.0
    %198 = vmatpush2.xpose.msra.mxu0 0.0
    %199 = vmatprep.subr.mxu0 0.0
    %200 = vmatpush2.xpose.msra.mxu0 0.0
    %201 = vmatprep.subr.mxu0 0.0
    %202 = vmatpush2.xpose.msra.mxu0 0.0
    %203 = vmatprep.subr.mxu0 0.0
    %204 = vmatpush2.xpose.msra.mxu0 0.0
    %205 = vmatprep.subr.mxu0 0.0
    %206 = vmatpush2.xpose.msra.mxu0 0.0
    %207 = vmatprep.subr.mxu0 0.0
    %208 = vmatpush2.xpose.msra.mxu0 0.0
    %209 = vmatprep.subr.mxu0 0.0
    %210 = vmatpush2.xpose.msra.mxu0 0.0
    %211 = vmatprep.subr.mxu0 0.0
    %212 = vmatpush2.xpose.msra.mxu0 0.0
    %213 = vmatprep.subr.mxu0 0.0
    %214 = vmatpush2.xpose.msra.mxu0 0.0
    %215 = vmatprep.subr.mxu0 0.0
    %216 = vmatpush2.xpose.msra.mxu0 0.0
    %217 = vmatprep.subr.mxu0 0.0
    %218 = vmatpush2.xpose.msra.mxu0 0.0
    %219 = vmatprep.subr.mxu0 0.0
    %220 = vmatpush2.xpose.msra.mxu0 0.0
    %221 = vmatprep.mubr.f32.mxu0 0.0
    %222 = vmatmul.mubr.f32.gmra.mxu0 %v152
    %v223 = vpop.f32.mrf.mxu0
    %v224 = vadd.f32 0.0, %v223
    %v225 = vpop.f32.mrf.mxu0
    %226 = vdwg.mxu0
    %v227 = vsel %vm66, -1e+30, %v148
    %v228 = vsel %vm67, -1e+30, %v224
    %vm229 = vcmask 64512
    %v230 = vsel %vm229, %v227, -inf
    %231 = vmax.xlane.f32.xlu0 %v230
    %v232 = vpop.xlane.xlu0 %231
    %v233 = vsel %vm229, %v228, -inf
    %234 = vmax.xlane.f32.xlu0 %v233
    %v235 = vpop.xlane.xlu0 %234
    %v236 = vsub.f32 %v232, 1.0
    %v237 = vsub.f32 %v235, 1.0
    loop: start=0, step=1, limit=30
    $region30: #{tpu_custom_call.1} parent=1 // loop_pre_header
      _
    $region31: #{tpu_custom_call.1} parent=1 // loop_header
      %s239 = sphi 0, %s243
      %p240 = scmp.ge.s32.totalorder %s239, 30
      %v244 = vphi %v236, %v264
      %v245 = vphi %v237, %v265
      %v246 = vphi %v232, %v266
      %v247 = vphi %v235, %v267
    $region32: #{tpu_custom_call.1} parent=1 // loop_header_branch
      %242 = sbr.rel (%p240) target = $region36
    $region33: #{tpu_custom_call.1} parent=1 // loop_body
      %v248 = vadd.f32 %v244, %v246
      %v249 = vadd.f32 %v245, %v247
      %v250 = vmul.f32 %v248, 0.5
      %v251 = vmul.f32 %v249, 0.5
      %v252 = vsub.f32 %v227, %v250
      %v253 = vsub.f32 %v228, %v251
      %v254 = vmax.f32 %v252, 0.0
      %v255 = vmax.f32 %v253, 0.0
      %v256 = vsel %vm229, %v254, 0.0
      %257 = vadd.xlane.f32.xlu0 %v256
      %v258 = vpop.xlane.xlu0 %257
      %v259 = vsel %vm229, %v255, 0.0
      %260 = vadd.xlane.f32.xlu0 %v259
      %v261 = vpop.xlane.xlu0 %260
      %vm262 = vcmp.gt.f32.partialorder %v258, 1.0
      %vm263 = vcmp.gt.f32.partialorder %v261, 1.0
      %v264 = vsel %vm262, %v250, %v244
      %v265 = vsel %vm263, %v251, %v245
      %v266 = vsel %vm262, %v246, %v250
      %v267 = vsel %vm263, %v247, %v251
    $region34: #{tpu_custom_call.1} parent=1 // loop_footer
      %s243 = sadd.s32 1, %s239
    $region35: #{tpu_custom_call.1} parent=1 // loop_footer_branch
      %238 = sbr.rel target = $region31
    $region36: #{tpu_custom_call.1} parent=1 // loop_exit
      _
    %v268 = vadd.f32 %v244, %v246
    %v269 = vadd.f32 %v245, %v247
    %v270 = vmul.f32 %v268, 0.5
    %v271 = vmul.f32 %v269, 0.5
    %v272 = vsub.f32 %v227, %v270
    %v273 = vsub.f32 %v228, %v271
    %v274 = vmax.f32 %v272, 0.0
    %v275 = vmax.f32 %v273, 0.0
    %v276 = vsel %vm66, 0.0, %v274
    %v277 = vsel %vm67, 0.0, %v275
    %v278 = vsel %vm66, 0.0, 1.0
    %v279 = vsel %vm67, 0.0, 1.0
    %v280 = vsel %vm229, %v278, 0.0
    %281 = vadd.xlane.f32.xlu0 %v280
    %v282 = vpop.xlane.xlu0 %281
    %v283 = vsel %vm229, %v279, 0.0
    %284 = vadd.xlane.f32.xlu0 %v283
    %v285 = vpop.xlane.xlu0 %284
    %vm286 = vcmp.eq.f32.partialorder %v282, 0.0
    %vm287 = vcmp.eq.f32.partialorder %v285, 0.0
    %v288 = vsel %vm286, 1, 0
    %v289 = vsel %vm287, 1, 0
    %vm290 = vcmp.eq.s32.totalorder %v288, 1
    %vm291 = vcmp.eq.s32.totalorder %v289, 1
    %v292 = vsel %vm290, 0.0, %v276
    %v293 = vsel %vm291, 0.0, %v277
    %v294 = vld [vmem:[#allocation7] sm:$0xff]
    %v295 = vld [vmem:[#allocation7 + $0x8] sm:$0xff]
    %v297 = vsel %vm229, %v292, 0
    %299 = vmatprep.subr.mxu0 0.0
    %300 = vmatpush1.msra.mxu0 0.0
    %301 = vmatprep.subr.mxu0 0.0
    %302 = vmatpush1.msra.mxu0 0.0
    %303 = vmatprep.subr.mxu0 0.0
    %304 = vmatpush1.msra.mxu0 0.0
    %305 = vmatprep.subr.mxu0 0.0
    %306 = vmatpush1.msra.mxu0 0.0
    %307 = vmatprep.subr.mxu0 0.0
    %308 = vmatpush1.msra.mxu0 0.0
    %309 = vmatprep.subr.mxu0 0.0
    %310 = vmatpush1.msra.mxu0 0.0
    %311 = vmatprep.subr.mxu0 0.0
    %312 = vmatpush1.msra.mxu0 0.0
    %313 = vmatprep.subr.mxu0 0.0
    %314 = vmatpush1.msra.mxu0 0.0
    %315 = vmatprep.subr.mxu0 0.0
    %316 = vmatpush1.msra.mxu0 0.0
    %317 = vmatprep.subr.mxu0 0.0
    %318 = vmatpush1.msra.mxu0 0.0
    %319 = vmatprep.subr.mxu0 0.0
    %320 = vmatpush1.msra.mxu0 0.0
    %321 = vmatprep.subr.mxu0 0.0
    %322 = vmatpush1.msra.mxu0 0.0
    %323 = vmatprep.subr.mxu0 0.0
    %324 = vmatpush1.msra.mxu0 0.0
    %325 = vmatprep.subr.mxu0 0.0
    %326 = vmatpush1.msra.mxu0 0.0
    %327 = vmatprep.subr.mxu0 0.0
    %328 = vmatpush1.msra.mxu0 0.0
    %329 = vmatprep.subr.mxu0 0.0
    %330 = vmatpush1.msra.mxu0 %v294
    %331 = vmatprep.subr.mxu0 0.0
    %332 = vmatpush2.msra.mxu0 0.0
    %333 = vmatprep.subr.mxu0 0.0
    %334 = vmatpush2.msra.mxu0 0.0
    %335 = vmatprep.subr.mxu0 0.0
    %336 = vmatpush2.msra.mxu0 0.0
    %337 = vmatprep.subr.mxu0 0.0
    %338 = vmatpush2.msra.mxu0 0.0
    %339 = vmatprep.subr.mxu0 0.0
    %340 = vmatpush2.msra.mxu0 0.0
    %341 = vmatprep.subr.mxu0 0.0
    %342 = vmatpush2.msra.mxu0 0.0
    %343 = vmatprep.subr.mxu0 0.0
    %344 = vmatpush2.msra.mxu0 0.0
    %345 = vmatprep.subr.mxu0 0.0
    %346 = vmatpush2.msra.mxu0 0.0
    %347 = vmatprep.subr.mxu0 0.0
    %348 = vmatpush2.msra.mxu0 0.0
    %349 = vmatprep.subr.mxu0 0.0
    %350 = vmatpush2.msra.mxu0 0.0
    %351 = vmatprep.subr.mxu0 0.0
    %352 = vmatpush2.msra.mxu0 0.0
    %353 = vmatprep.subr.mxu0 0.0
    %354 = vmatpush2.msra.mxu0 0.0
    %355 = vmatprep.subr.mxu0 0.0
    %356 = vmatpush2.msra.mxu0 0.0
    %357 = vmatprep.subr.mxu0 0.0
    %358 = vmatpush2.msra.mxu0 0.0
    %359 = vmatprep.subr.mxu0 0.0
    %360 = vmatpush2.msra.mxu0 0.0
    %361 = vmatprep.subr.mxu0 0.0
    %362 = vmatpush2.msra.mxu0 0.0
    %363 = vmatprep.mubr.f32.mxu0 0.0
    %364 = vmatmul.mubr.f32.gmra.mxu0 %v297
    %v365 = vpop.f32.mrf.mxu0
    %v366 = vadd.f32 0.0, %v365
    %v367 = vpop.f32.mrf.mxu0
    %368 = vdwg.mxu0
    %v370 = vsel %vm229, %v293, 0
    %372 = vmatprep.subr.mxu0 0.0
    %373 = vmatpush1.msra.mxu0 0.0
    %374 = vmatprep.subr.mxu0 0.0
    %375 = vmatpush1.msra.mxu0 0.0
    %376 = vmatprep.subr.mxu0 0.0
    %377 = vmatpush1.msra.mxu0 0.0
    %378 = vmatprep.subr.mxu0 0.0
    %379 = vmatpush1.msra.mxu0 0.0
    %380 = vmatprep.subr.mxu0 0.0
    %381 = vmatpush1.msra.mxu0 0.0
    %382 = vmatprep.subr.mxu0 0.0
    %383 = vmatpush1.msra.mxu0 0.0
    %384 = vmatprep.subr.mxu0 0.0
    %385 = vmatpush1.msra.mxu0 0.0
    %386 = vmatprep.subr.mxu0 0.0
    %387 = vmatpush1.msra.mxu0 0.0
    %388 = vmatprep.subr.mxu0 0.0
    %389 = vmatpush1.msra.mxu0 0.0
    %390 = vmatprep.subr.mxu0 0.0
    %391 = vmatpush1.msra.mxu0 0.0
    %392 = vmatprep.subr.mxu0 0.0
    %393 = vmatpush1.msra.mxu0 0.0
    %394 = vmatprep.subr.mxu0 0.0
    %395 = vmatpush1.msra.mxu0 0.0
    %396 = vmatprep.subr.mxu0 0.0
    %397 = vmatpush1.msra.mxu0 0.0
    %398 = vmatprep.subr.mxu0 0.0
    %399 = vmatpush1.msra.mxu0 0.0
    %400 = vmatprep.subr.mxu0 0.0
    %401 = vmatpush1.msra.mxu0 0.0
    %402 = vmatprep.subr.mxu0 0.0
    %403 = vmatpush1.msra.mxu0 %v295
    %404 = vmatprep.subr.mxu0 0.0
    %405 = vmatpush2.msra.mxu0 0.0
    %406 = vmatprep.subr.mxu0 0.0
    %407 = vmatpush2.msra.mxu0 0.0
    %408 = vmatprep.subr.mxu0 0.0
    %409 = vmatpush2.msra.mxu0 0.0
    %410 = vmatprep.subr.mxu0 0.0
    %411 = vmatpush2.msra.mxu0 0.0
    %412 = vmatprep.subr.mxu0 0.0
    %413 = vmatpush2.msra.mxu0 0.0
    %414 = vmatprep.subr.mxu0 0.0
    %415 = vmatpush2.msra.mxu0 0.0
    %416 = vmatprep.subr.mxu0 0.0
    %417 = vmatpush2.msra.mxu0 0.0
    %418 = vmatprep.subr.mxu0 0.0
    %419 = vmatpush2.msra.mxu0 0.0
    %420 = vmatprep.subr.mxu0 0.0
    %421 = vmatpush2.msra.mxu0 0.0
    %422 = vmatprep.subr.mxu0 0.0
    %423 = vmatpush2.msra.mxu0 0.0
    %424 = vmatprep.subr.mxu0 0.0
    %425 = vmatpush2.msra.mxu0 0.0
    %426 = vmatprep.subr.mxu0 0.0
    %427 = vmatpush2.msra.mxu0 0.0
    %428 = vmatprep.subr.mxu0 0.0
    %429 = vmatpush2.msra.mxu0 0.0
    %430 = vmatprep.subr.mxu0 0.0
    %431 = vmatpush2.msra.mxu0 0.0
    %432 = vmatprep.subr.mxu0 0.0
    %433 = vmatpush2.msra.mxu0 0.0
    %434 = vmatprep.subr.mxu0 0.0
    %435 = vmatpush2.msra.mxu0 0.0
    %436 = vmatprep.mubr.f32.mxu0 0.0
    %437 = vmatmul.mubr.f32.gmra.mxu0 %v370
    %v438 = vpop.f32.mrf.mxu0
    %v439 = vadd.f32 0.0, %v438
    %v440 = vpop.f32.mrf.mxu0
    %441 = vdwg.mxu0
    %442 = vst.msk [vmem:[#allocation8] sm:$0xff] %vm74, %v366
    %443 = vst.msk [vmem:[#allocation8 + $0x8] sm:$0xff] %vm74, %v439
    %444 = vst.msk [vmem:[#allocation9] sm:$0xff] %vm229, %v292
    %445 = vst.msk [vmem:[#allocation9 + $0x8] sm:$0xff] %vm229, %v293
    // Predicated region
    $region37: #{tpu_custom_call.1} parent=1 // pred_check
      _
    $region38: #{tpu_custom_call.1} parent=1 // pred_check_branch
      %447 = sbr.rel (0) target = $region40
    $region39: #{tpu_custom_call.1} parent=1 // pred_region
      %s449 = ssub.s32 256, 256
      %450 = vsyncadd [#allocation4], %s449
      %s451 = sshll.u32 [#allocation8], 4
      %s452 = int_to_ptr.vmem [resolvable:$true] %s451
      %457 = dma.vmem_to_hbm [thread:$0]  %s452, 256, %s4, [#allocation4], 128, 128, 8
    $region40: #{tpu_custom_call.1} parent=1 // pred_fallthru
      _
    // Predicated region
    $region41: #{tpu_custom_call.1} parent=1 // pred_check
      _
    $region42: #{tpu_custom_call.1} parent=1 // pred_check_branch
      %459 = sbr.rel (0) target = $region44
    $region43: #{tpu_custom_call.1} parent=1 // pred_region
      %s461 = ssub.s32 256, 256
      %462 = vsyncadd [#allocation10], %s461
      %s463 = sshll.u32 [#allocation9], 4
      %s464 = int_to_ptr.vmem [resolvable:$true] %s463
      %469 = dma.vmem_to_hbm [thread:$0]  %s464, 256, %s5, [#allocation10], 128, 128, 8
    $region44: #{tpu_custom_call.1} parent=1 // pred_fallthru
      _
    // Predicated region
    $region45: #{tpu_custom_call.1} parent=1 // pred_check
      _
    $region46: #{tpu_custom_call.1} parent=1 // pred_check_branch
      %471 = sbr.rel (0) target = $region48
    $region47: #{tpu_custom_call.1} parent=1 // pred_region
      %472 = dma.done [#allocation4], 256
    $region48: #{tpu_custom_call.1} parent=1 // pred_fallthru
      _
    // Predicated region
    $region49: #{tpu_custom_call.1} parent=1 // pred_check
      _
    $region50: #{tpu_custom_call.1} parent=1 // pred_check_branch
      %474 = sbr.rel (0) target = $region52
    $region51: #{tpu_custom_call.1} parent=1 // pred_region
      %475 = dma.done [#allocation10], 256
    $region52: #{tpu_custom_call.1} parent=1 // pred_fallthru
      _
    %476 = vsyncpa [#allocation3], 1
    %477 = vsyncpa [#allocation6], 1
    %478 = vsyncpa [#allocation4], 1
    %479 = vsyncpa [#allocation10], 1

</llo_original>
